<compile_context>
chip_gen: v5e
topology: v5e:2x2
jax: 0.10.0
libtpu: 0.0.40
codegen_flags: <defaults>
</compile_context>

<pallas_src>
import math

import jax
import jax.numpy as jnp
from jax.experimental import pallas as pl
from jax.experimental.pallas import tpu as pltpu


def _guiding_kernel(x_ref, w_ref, b_ref, g_ref, o_ref):
    # x_ref : (tm, D)   rows of the flattened (B*S, D) input
    # w_ref : (D, tn)   pre-transposed Linear weight tile
    # b_ref : (1, tn)   Linear bias tile
    # g_ref : (S, tn)   clipped-PM gate (one row per sequence position)
    # o_ref : (tm, tn)
    y = jnp.dot(x_ref[...], w_ref[...], preferred_element_type=jnp.float32)
    y = y + b_ref[...]                           # broadcast (1, tn) over rows
    y = jnp.where(y >= 0.0, y, 0.2 * y)          # LeakyReLU(0.2)
    reps = o_ref.shape[0] // g_ref.shape[0]      # tm // S (static)
    gate = jnp.tile(g_ref[...], (reps, 1))       # row r gates seq position r % S
    o_ref[...] = (y * gate).astype(o_ref.dtype)


def _round_up(x, m):
    return (x + m - 1) // m * m


def _divisors_desc(n):
    small, large = [], []
    d = 1
    while d * d <= n:
        if n % d == 0:
            small.append(d)
            if d != n // d:
                large.append(n // d)
        d += 1
    return sorted(small + large, reverse=True)


def _vmem_capacity_bytes():
    try:
        return int(pltpu.get_tpu_info().vmem_capacity_bytes)
    except Exception:
        return 64 * 1024 * 1024  # conservative (v7x per-TC size)


def _pick_tiles(B, S, D, P, tm_target, tn_target, vmem_budget):
    """Pick (tm, tn, M_pad, P_pad) for the (P_tiles, M_tiles) grid."""
    M = B * S
    P_pad = _round_up(P, 128)

    # Lane tiles: multiples of 128 that divide P_pad (unmasked, lane-dense vst).
    tn_target = max(128, (int(tn_target) // 128) * 128)
    tn_cands = [t for t in range(P_pad, 0, -128) if P_pad % t == 0]
    tn = next(t for t in tn_cands if t <= tn_target or t == 128)

    # Row tiles: prefer tm = S*k with k | B (so tm | M -> no pad, no row slice)
    # and tm 8-aligned (or tm == M, i.e. full extent).
    tm_cands = []
    for k in _divisors_desc(B):
        tm_c = S * k
        if tm_c <= tm_target and (tm_c % 8 == 0 or tm_c == M):
            tm_cands.append(tm_c)
    if tm_cands:
        tm = tm_cands[0]
    else:
        base = S * 8 // math.gcd(S, 8)                      # lcm(S, 8)
        cap = max(base, min(tm_target, _round_up(M, base)))
        tm = base * max(1, cap // base)
        tm_cands = list(range(tm, 0, -base))

    # Per-step VMEM estimate (f32, double-buffered): x + w + bias + gate + out.
    def vmem_bytes(tm_, tn_):
        per_step = tm_ * D + D * tn_ + tn_ + S * tn_ + tm_ * tn_
        return 2 * per_step * 4

    while vmem_bytes(tm, tn) > vmem_budget:
        smaller_tn = [t for t in tn_cands if t < tn]
        smaller_tm = [t for t in tm_cands if t < tm]
        if smaller_tn:
            tn = smaller_tn[0]
        elif smaller_tm:
            tm = smaller_tm[0]
        else:
            break

    M_pad = M if M % tm == 0 else _round_up(M, tm)

    # Megacore: make sure a "parallel" axis has >= 2 blocks when possible
    # (a 1x1 grid would leave one v7x TensorCore idle).
    if (P_pad // tn) * (M_pad // tm) < 2:
        smaller_tn = [t for t in tn_cands if t < tn]
        smaller_tm = [t for t in tm_cands if t < tm]
        if smaller_tn:
            tn = smaller_tn[0]
        elif smaller_tm:
            tm = smaller_tm[0]
            M_pad = M if M % tm == 0 else _round_up(M, tm)

    return tm, tn, M_pad, P_pad


def guiding_forward(outputs, AM, PM, weight, bias, *, tm_target=512, tn_target=2048):
    """outputs: (B, S, D) f32; PM: (P, T) f32 with T >= S; weight: (P, D); bias: (P,)."""
    del AM  # unused, as in the reference module

    B, S, D = outputs.shape
    P = weight.shape[0]
    M = B * S

    vmem_cap = _vmem_capacity_bytes()
    vmem_budget = int(0.70 * vmem_cap)          # ~45 MiB on v7x, ~90 MiB on v5e/v6e
    tm, tn, M_pad, P_pad = _pick_tiles(B, S, D, P, tm_target, tn_target, vmem_budget)

    # Flatten batch*seq; row padding only if no divisor-based tm existed.
    x = outputs.reshape(M, D)
    if M_pad != M:
        x = jnp.pad(x, ((0, M_pad - M), (0, 0)))

    # One-time (P, D) -> (D, P) transpose in XLA; amortized over the whole grid.
    w = weight.T
    b2 = bias.reshape(1, P)
    gate = PM[:, :S].T                          # (S, P), broadcast in-kernel
    if P_pad != P:
        pad_p = P_pad - P
        w = jnp.pad(w, ((0, 0), (0, pad_p)))
        b2 = jnp.pad(b2, ((0, 0), (0, pad_p)))
        gate = jnp.pad(gate, ((0, 0), (0, pad_p)))

    grid = (P_pad // tn, M_pad // tm)           # P outer -> w/bias/gate reuse across M tiles

    flops = 2 * M_pad * P_pad * D
    bytes_accessed = 4 * (M_pad * D + D * P_pad + P_pad + S * P_pad + M_pad * P_pad)

    out = pl.pallas_call(
        _guiding_kernel,
        out_shape=jax.ShapeDtypeStruct((M_pad, P_pad), jnp.float32),
        grid_spec=pltpu.PrefetchScalarGridSpec(
            num_scalar_prefetch=0,
            grid=grid,
            in_specs=[
                pl.BlockSpec((tm, D), lambda j, i: (i, 0)),   # x rows: vary with inner axis
                pl.BlockSpec((D, tn), lambda j, i: (0, j)),   # weight: resident across M tiles
                pl.BlockSpec((1, tn), lambda j, i: (0, j)),   # bias:   resident across M tiles
                pl.BlockSpec((S, tn), lambda j, i: (0, j)),   # gate:   tiny, resident across M tiles
            ],
            out_specs=pl.BlockSpec((tm, tn), lambda j, i: (i, j)),
        ),
        compiler_params=pltpu.CompilerParams(
            dimension_semantics=("parallel", "parallel"),
            vmem_limit_bytes=int(0.85 * vmem_cap),
        ),
        cost_estimate=pl.CostEstimate(
            flops=flops, transcendentals=0, bytes_accessed=bytes_accessed),
    )(x, w, b2, gate)

    if M_pad != M or P_pad != P:
        out = out[:M, :P]
    return out.reshape(B, S, P)


def _reference(outputs, PM, weight, bias):
    # Pure-JAX reference mirroring the PyTorch code.
    fix = outputs @ weight.T + bias
    fix = jnp.where(fix >= 0.0, fix, 0.2 * fix)
    S = fix.shape[1]
    clipped_PM = PM[:, :S]
    return fix * clipped_PM.T[None, :, :]


def _run_case(B, S, D, P, T, seed):
    key = jax.random.PRNGKey(seed)
    k_out, k_am, k_pm, k_w, k_b = jax.random.split(key, 5)

    outputs = jax.random.normal(k_out, (B, S, D), dtype=jnp.float32)
    AM = jax.random.normal(k_am, (P, P), dtype=jnp.float32)   # unused by forward
    PM = jax.random.normal(k_pm, (P, T), dtype=jnp.float32)

    bound = 1.0 / (D ** 0.5)
    weight = jax.random.uniform(k_w, (P, D), minval=-bound, maxval=bound, dtype=jnp.float32)
    bias = jax.random.uniform(k_b, (P,), minval=-bound, maxval=bound, dtype=jnp.float32)

    result = guiding_forward(outputs, AM, PM, weight, bias)
    result = jax.block_until_ready(result)

    expected = _reference(outputs, PM, weight, bias)
    assert result.shape == (B, S, P)
    assert jnp.allclose(result, expected, atol=1e-5, rtol=1e-5)


if __name__ == "__main__":
    # Primary small shapes consistent with the module:
    #   out_dim (D) = 32, poi_size (P) = 128, batch (B) = 2, seq (S) = 8, PM time dim T = 16
    _run_case(B=2, S=8, D=32, P=128, T=16, seed=0)
    # Secondary case exercising the poi_size padding path (P not a multiple of 128).
    _run_case(B=6, S=4, D=40, P=200, T=9, seed=1)

    print("KERNEL_OK")
</pallas_src>

<mosaic_0001>
module attributes {stable_mosaic.version = 11 : i64} {
  func.func @_guiding_kernel(%arg0: i32, %arg1: i32, %arg2: memref<8x32xf32, #tpu.memory_space<vmem>>, %arg3: memref<32x128xf32, #tpu.memory_space<vmem>>, %arg4: memref<1x128xf32, #tpu.memory_space<vmem>>, %arg5: memref<8x128xf32, #tpu.memory_space<vmem>>, %arg6: memref<8x128xf32, #tpu.memory_space<vmem>>) attributes {dimension_semantics = [#tpu.dimension_semantics<parallel>, #tpu.dimension_semantics<parallel>], iteration_bounds = array<i64: 1, 2>, scalar_prefetch = 0 : i64, scratch_operands = 0 : i64, tpu.core_type = #tpu.core_type<tc>, window_params = [{transform_indices = @transform_0, window_bounds = array<i64: 8, 32>}, {transform_indices = @transform_1, window_bounds = array<i64: 32, 128>}, {transform_indices = @transform_2, window_bounds = array<i64: 1, 128>}, {transform_indices = @transform_3, window_bounds = array<i64: 8, 128>}, {transform_indices = @transform_4, window_bounds = array<i64: 8, 128>}]} {
    %c0 = arith.constant 0 : index
    %c0_0 = arith.constant 0 : index
    %0 = vector.load %arg2[%c0, %c0_0] : memref<8x32xf32, #tpu.memory_space<vmem>>, vector<8x32xf32>
    %c0_1 = arith.constant 0 : index
    %c0_2 = arith.constant 0 : index
    %1 = vector.load %arg3[%c0_1, %c0_2] : memref<32x128xf32, #tpu.memory_space<vmem>>, vector<32x128xf32>
    %cst = arith.constant dense<0.000000e+00> : vector<8x128xf32>
    %2 = tpu.matmul %0, %1, %cst {dimension_numbers = #tpu.dot_dimension_numbers<[1], [0], [0], [1], [0, 0, 1, 1], [], []>} : vector<8x32xf32>, vector<32x128xf32>, vector<8x128xf32> -> vector<8x128xf32>
    %c0_3 = arith.constant 0 : index
    %c0_4 = arith.constant 0 : index
    %3 = vector.load %arg4[%c0_3, %c0_4] : memref<1x128xf32, #tpu.memory_space<vmem>>, vector<1x128xf32>
    %4 = vector.broadcast %3 : vector<1x128xf32> to vector<8x128xf32>
    %5 = arith.addf %2, %4 : vector<8x128xf32>
    %cst_5 = arith.constant 0.000000e+00 : f32
    %6 = vector.broadcast %cst_5 : f32 to vector<8x128xf32>
    %7 = arith.cmpf oge, %5, %6 : vector<8x128xf32>
    %cst_6 = arith.constant 2.000000e-01 : f32
    %8 = vector.broadcast %cst_6 : f32 to vector<8x128xf32>
    %9 = arith.mulf %8, %5 : vector<8x128xf32>
    %10 = arith.select %7, %5, %9 : vector<8x128xi1>, vector<8x128xf32>
    %c0_7 = arith.constant 0 : index
    %c0_8 = arith.constant 0 : index
    %11 = vector.load %arg5[%c0_7, %c0_8] : memref<8x128xf32, #tpu.memory_space<vmem>>, vector<8x128xf32>
    %12 = arith.mulf %10, %11 : vector<8x128xf32>
    %c0_9 = arith.constant 0 : index
    %c0_10 = arith.constant 0 : index
    %13 = vector.load %arg6[%c0_9, %c0_10] : memref<8x128xf32, #tpu.memory_space<vmem>>, vector<8x128xf32>
    tpu.vector_store %arg6[%c0_9, %c0_10], %12 {strides = array<i32>} : memref<8x128xf32, #tpu.memory_space<vmem>>, vector<8x128xf32>,
    return
  }
  func.func @transform_0(%arg0: i32, %arg1: i32) -> (i32, i32) {
    %c0_i32 = arith.constant 0 : i32
    %c0_i32_0 = arith.constant 0 : i32
    return %arg1, %c0_i32 : i32, i32
  }
  func.func @transform_1(%arg0: i32, %arg1: i32) -> (i32, i32) {
    %c0_i32 = arith.constant 0 : i32
    %c0_i32_0 = arith.constant 0 : i32
    return %c0_i32, %arg0 : i32, i32
  }
  func.func @transform_2(%arg0: i32, %arg1: i32) -> (i32, i32) {
    %c0_i32 = arith.constant 0 : i32
    %c0_i32_0 = arith.constant 0 : i32
    return %c0_i32, %arg0 : i32, i32
  }
  func.func @transform_3(%arg0: i32, %arg1: i32) -> (i32, i32) {
    %c0_i32 = arith.constant 0 : i32
    %c0_i32_0 = arith.constant 0 : i32
    return %c0_i32, %arg0 : i32, i32
  }
  func.func @transform_4(%arg0: i32, %arg1: i32) -> (i32, i32) {
    %c0_i32 = arith.constant 0 : i32
    return %arg1, %arg0 : i32, i32
  }
}

</mosaic_0001>

<llo_original>
// kernel: tpu_custom_call.1
$region0: #{tpu_custom_call.1}
  #allocation0 [shape = 'u32[]', space=smem, size = 0x4, offset = 0x4, fixed_abs, tag = 'smem constant byte address 0x4 - core index']
  #allocation1 [shape = 'u32[72,128]{1,0:T(1,128)}', space=vmem, size = 0x9000, scoped, tag = 'internal scratch']
  %s0 = inlined_call_operand.hbm [shape: f32[16,32], index: 0, kind: input, shape index: {}]
  %s1 = inlined_call_operand.hbm [shape: f32[32,128], index: 1, kind: input, shape index: {}]
  %s2 = inlined_call_operand.vmem [shape: f32[1,128], index: 2, kind: input, shape index: {}]
  %s3 = inlined_call_operand.hbm [shape: f32[8,128], index: 3, kind: input, shape index: {}]
  %s4 = inlined_call_operand.hbm [shape: f32[16,128], index: 4, kind: output, shape index: {}]
  %s5 = sld [smem:[#allocation0]]
  $region61: #{tpu_custom_call.1} parent=0
    _
  %s7 = ssub.s32 1, %s5
  %s8 = scalar_select 0, %s7, %s5
  $region1: #{tpu_custom_call.1} parent=0
    #allocation2 [shape = 'u8[8192]{0}', space=vmem, size = 0x2000, scoped, tag = 'input window, operand 0']
    #allocation3 [shape = 's32[2]{0}', space=sflag, size = 0x8, scoped, tag = 'scoped memory for tpu_custom_call.1']
    #allocation4 [shape = 's32[2]{0}', space=sflag, size = 0x8, scoped, tag = 'scoped memory for tpu_custom_call.1']
    #allocation5 [shape = 'u8[16384]{0}', space=vmem, size = 0x4000, scoped, tag = 'input window, operand 1, single buffered']
    #allocation6 [shape = 's32[1]{0}', space=sflag, size = 0x4, scoped, tag = 'scoped memory for tpu_custom_call.1']
    #allocation7 [shape = 'u8[4096]{0}', space=vmem, size = 0x1000, scoped, tag = 'input window, operand 3, single buffered']
    #allocation8 [shape = 'u8[8192]{0}', space=vmem, size = 0x2000, scoped, tag = 'output window, operand 0']
    %9 = vsyncpa [#allocation3], 0
    %s10 = scalar_lea.sflag [#allocation3], 1
    %11 = vsyncpa %s10, 0
    %12 = vsyncpa [#allocation6], 0
    %13 = vsyncpa [#allocation4], 0
    %s14 = scalar_lea.sflag [#allocation4], 1
    %15 = vsyncpa %s14, 0
    loop: start=0, step=1, limit=4
    $region2: #{tpu_custom_call.1} parent=1 // loop_pre_header
      _
    $region3: #{tpu_custom_call.1} parent=1 // loop_header
      %s17 = sphi 0, %s21
      %p18 = scmp.ge.s32.totalorder %s17, 4
      %s24 = sphi 0, %s36
      %s25 = sphi 0, %s32
      %s26 = sphi 0, %s24
      %s27 = sphi 0, %s25
      %s28 = sphi 0, %s26
      %s29 = sphi 0, %s27
      %s39 = sphi 0, %s41
      %s42 = sphi 0, %s39
      %s43 = sphi 0, %s42
      %s59 = sphi 0, %s43
      %s65 = sphi 0, %s67
      %s68 = sphi 0, %s65
      %s69 = sphi 0, %s68
      %s85 = sphi 0, %s69
      %s91 = sphi 0, %s93
      %s94 = sphi 0, %s91
      %s95 = sphi 0, %s94
      %s111 = sphi 0, %s95
      %s117 = sphi 0, %s119
      %s120 = sphi 0, %s117
      %s121 = sphi 0, %s120
      %s137 = sphi 0, %s121
      %s145 = sphi 0, %s147
      %s148 = sphi 0, %s145
      %s149 = sphi 0, %s148
      %s165 = sphi 0, %s149
    $region4: #{tpu_custom_call.1} parent=1 // loop_header_branch
      %20 = sbr.rel (%p18) target = $region8
    $region5: #{tpu_custom_call.1} parent=1 // loop_body
      %s22 = ssub.s32 %s17, 1
      %s23 = ssub.s32 %s17, 2
      %s30 = sadd.s32 1, %s25
      %p31 = scmp.ge.s32.totalorder %s30, 2
      %s32 = scalar_select %p31, 0, %s30
      %s33 = sadd.s32 1, %s24
      %s34 = scalar_select %p31, %s33, %s24
      %p35 = scmp.ge.s32.totalorder %s34, 1
      %s36 = scalar_select %p35, 0, %s34
      %s37 = ssub.s32 %s25, %s32
      %p38 = scmp.eq.s32.totalorder %s37, 0
      %s40 = sadd.s32 %s39, 1
      %s41 = scalar_select %p38, %s39, %s40
      %p44 = pneg %p38
      %p45 = scmp.eq.s32.totalorder %s17, 1
      %p46 = por %p44, %p45
      %p47 = scmp.ne.s32.totalorder %s39, %s42
      %p48 = scmp.eq.s32.totalorder %s17, 0
      %p49 = por %p47, %p48
      %p50 = scmp.ne.s32.totalorder %s39, %s42
      %p51 = scmp.eq.s32.totalorder %s22, 1
      %p52 = por %p50, %p51
      %p53 = scmp.ne.s32.totalorder %s42, %s43
      %p54 = scmp.eq.s32.totalorder %s22, 0
      %p55 = por %p53, %p54
      %p56 = scmp.ne.s32.totalorder %s42, %s43
      %p57 = scmp.eq.s32.totalorder %s23, 1
      %p58 = por %p56, %p57
      %p60 = scmp.ne.s32.totalorder %s43, %s59
      %p61 = scmp.eq.s32.totalorder %s23, 0
      %p62 = por %p60, %p61
      %s63 = ssub.s32 %s24, %s36
      %p64 = scmp.eq.s32.totalorder %s63, 0
      %s66 = sadd.s32 %s65, 1
      %s67 = scalar_select %p64, %s65, %s66
      %p70 = pneg %p64
      %p71 = scmp.eq.s32.totalorder %s17, 1
      %p72 = por %p70, %p71
      %p73 = scmp.ne.s32.totalorder %s65, %s68
      %p74 = scmp.eq.s32.totalorder %s17, 0
      %p75 = por %p73, %p74
      %p76 = scmp.ne.s32.totalorder %s65, %s68
      %p77 = scmp.eq.s32.totalorder %s22, 1
      %p78 = por %p76, %p77
      %p79 = scmp.ne.s32.totalorder %s68, %s69
      %p80 = scmp.eq.s32.totalorder %s22, 0
      %p81 = por %p79, %p80
      %p82 = scmp.ne.s32.totalorder %s68, %s69
      %p83 = scmp.eq.s32.totalorder %s23, 1
      %p84 = por %p82, %p83
      %p86 = scmp.ne.s32.totalorder %s69, %s85
      %p87 = scmp.eq.s32.totalorder %s23, 0
      %p88 = por %p86, %p87
      %s89 = ssub.s32 %s24, %s36
      %p90 = scmp.eq.s32.totalorder %s89, 0
      %s92 = sadd.s32 %s91, 1
      %s93 = scalar_select %p90, %s91, %s92
      %p96 = pneg %p90
      %p97 = scmp.eq.s32.totalorder %s17, 1
      %p98 = por %p96, %p97
      %p99 = scmp.ne.s32.totalorder %s91, %s94
      %p100 = scmp.eq.s32.totalorder %s17, 0
      %p101 = por %p99, %p100
      %p102 = scmp.ne.s32.totalorder %s91, %s94
      %p103 = scmp.eq.s32.totalorder %s22, 1
      %p104 = por %p102, %p103
      %p105 = scmp.ne.s32.totalorder %s94, %s95
      %p106 = scmp.eq.s32.totalorder %s22, 0
      %p107 = por %p105, %p106
      %p108 = scmp.ne.s32.totalorder %s94, %s95
      %p109 = scmp.eq.s32.totalorder %s23, 1
      %p110 = por %p108, %p109
      %p112 = scmp.ne.s32.totalorder %s95, %s111
      %p113 = scmp.eq.s32.totalorder %s23, 0
      %p114 = por %p112, %p113
      %s115 = ssub.s32 %s24, %s36
      %p116 = scmp.eq.s32.totalorder %s115, 0
      %s118 = sadd.s32 %s117, 1
      %s119 = scalar_select %p116, %s117, %s118
      %p122 = pneg %p116
      %p123 = scmp.eq.s32.totalorder %s17, 1
      %p124 = por %p122, %p123
      %p125 = scmp.ne.s32.totalorder %s117, %s120
      %p126 = scmp.eq.s32.totalorder %s17, 0
      %p127 = por %p125, %p126
      %p128 = scmp.ne.s32.totalorder %s117, %s120
      %p129 = scmp.eq.s32.totalorder %s22, 1
      %p130 = por %p128, %p129
      %p131 = scmp.ne.s32.totalorder %s120, %s121
      %p132 = scmp.eq.s32.totalorder %s22, 0
      %p133 = por %p131, %p132
      %p134 = scmp.ne.s32.totalorder %s120, %s121
      %p135 = scmp.eq.s32.totalorder %s23, 1
      %p136 = por %p134, %p135
      %p138 = scmp.ne.s32.totalorder %s121, %s137
      %p139 = scmp.eq.s32.totalorder %s23, 0
      %p140 = por %p138, %p139
      %s141 = ssub.s32 %s25, %s32
      %s142 = ssub.s32 %s24, %s36
      %s143 = sor.u32 %s141, %s142
      %p144 = scmp.eq.s32.totalorder %s143, 0
      %s146 = sadd.s32 %s145, 1
      %s147 = scalar_select %p144, %s145, %s146
      %p150 = pneg %p144
      %p151 = scmp.eq.s32.totalorder %s17, 1
      %p152 = por %p150, %p151
      %p153 = scmp.ne.s32.totalorder %s145, %s148
      %p154 = scmp.eq.s32.totalorder %s17, 0
      %p155 = por %p153, %p154
      %p156 = scmp.ne.s32.totalorder %s145, %s148
      %p157 = scmp.eq.s32.totalorder %s22, 1
      %p158 = por %p156, %p157
      %p159 = scmp.ne.s32.totalorder %s148, %s149
      %p160 = scmp.eq.s32.totalorder %s22, 0
      %p161 = por %p159, %p160
      %p162 = scmp.ne.s32.totalorder %s148, %s149
      %p163 = scmp.eq.s32.totalorder %s23, 1
      %p164 = por %p162, %p163
      %p166 = scmp.ne.s32.totalorder %s149, %s165
      %p167 = scmp.eq.s32.totalorder %s23, 0
      %p168 = por %p166, %p167
      %p169 = scmp.le.s32.totalorder 1, %s17
      %p170 = scmp.lt.s32.totalorder %s17, 3
      %p171 = pnand %p169, %p170
      %p172 = pneg %p171
      // Predicated region
      $region9: #{tpu_custom_call.1} parent=5 // pred_check
        _
      $region10: #{tpu_custom_call.1} parent=5 // pred_check_branch
        %174 = sbr.rel (%p171) target = $region12
      $region11: #{tpu_custom_call.1} parent=5 // pred_region
        %s175 = ssub.s32 %s17, 1
        // Predicated region
        $region13: #{tpu_custom_call.1} parent=11 // pred_check
          %p176 = pneg %p81
        $region14: #{tpu_custom_call.1} parent=11 // pred_check_branch
          %178 = sbr.rel (%p176) target = $region16
        $region15: #{tpu_custom_call.1} parent=11 // pred_region
          %180 = vsyncadd [#allocation6], 0
          %s181 = smul.addr %s26, 8
          %s182 = scalar_lea.hbm %s1, %s181
          %s183 = sshll.u32 %s182, 4
          %s184 = int_to_ptr.hbm [resolvable:$true] %s183
          %s185 = sshll.u32 [#allocation5], 4
          %s186 = int_to_ptr.vmem [resolvable:$true] %s185
          %191 = dma.hbm_to_vmem [thread:$0]  %s184, 512, %s186, [#allocation6], 128, 128, 8
        $region16: #{tpu_custom_call.1} parent=11 // pred_fallthru
          _
        // Predicated region
        $region17: #{tpu_custom_call.1} parent=11 // pred_check
          %p192 = pneg %p107
        $region18: #{tpu_custom_call.1} parent=11 // pred_check_branch
          %194 = sbr.rel (%p192) target = $region20
        $region19: #{tpu_custom_call.1} parent=11 // pred_region
          %p195 = scmp.lt.s32.totalorder %s26, 0
          %s196 = scalar_select %p195, %s26, 0
          %s197 = scalar_lea.vmem %s2, %s196
        $region20: #{tpu_custom_call.1} parent=11 // pred_fallthru
          _
        // Predicated region
        $region21: #{tpu_custom_call.1} parent=11 // pred_check
          %p198 = pneg %p133
        $region22: #{tpu_custom_call.1} parent=11 // pred_check_branch
          %200 = sbr.rel (%p198) target = $region24
        $region23: #{tpu_custom_call.1} parent=11 // pred_region
          %202 = vsyncadd [#allocation6], 0
          %s203 = smul.addr %s26, 8
          %s204 = scalar_lea.hbm %s3, %s203
          %s206 = sshll.u32 %s204, 4
          %s207 = int_to_ptr.hbm [resolvable:$true] %s206
          %s208 = sshll.u32 [#allocation7], 4
          %s209 = int_to_ptr.vmem [resolvable:$true] %s208
          %211 = dma.hbm_to_vmem [thread:$0]  %s207, 128, %s209, [#allocation6]
        $region24: #{tpu_custom_call.1} parent=11 // pred_fallthru
          _
      $region12: #{tpu_custom_call.1} parent=5 // pred_fallthru
        _
      %p212 = scmp.lt.s32.totalorder %s17, 2
      // Predicated region
      $region25: #{tpu_custom_call.1} parent=5 // pred_check
        %p213 = pneg %p212
      $region26: #{tpu_custom_call.1} parent=5 // pred_check_branch
        %215 = sbr.rel (%p213) target = $region28
      $region27: #{tpu_custom_call.1} parent=5 // pred_region
        // Predicated region
        $region29: #{tpu_custom_call.1} parent=27 // pred_check
          %p216 = pneg %p49
        $region30: #{tpu_custom_call.1} parent=27 // pred_check_branch
          %218 = sbr.rel (%p216) target = $region32
        $region31: #{tpu_custom_call.1} parent=27 // pred_region
          %s219 = sand.u32 %s39, 1
          %s220 = scalar_lea.sflag [#allocation3], %s219
          %s221 = sand.u32 %s39, 1
          %s222 = smul.addr %s221, 8
          %s223 = scalar_lea.vmem [#allocation2], %s222
          %225 = vsyncadd %s220, 0
          %s226 = smul.addr %s25, 8
          %s227 = scalar_lea.hbm %s0, %s226
          %s229 = sshll.u32 %s227, 4
          %s230 = int_to_ptr.hbm [resolvable:$true] %s229
          %s231 = sshll.u32 %s223, 4
          %s232 = int_to_ptr.vmem [resolvable:$true] %s231
          %234 = dma.hbm_to_vmem [thread:$0]  %s230, 128, %s232, %s220
        $region32: #{tpu_custom_call.1} parent=27 // pred_fallthru
          _
      $region28: #{tpu_custom_call.1} parent=5 // pred_fallthru
        _
      %p235 = scmp.le.s32.totalorder 1, %s17
      %p236 = scmp.lt.s32.totalorder %s17, 3
      %p237 = pnand %p235, %p236
      %p238 = pneg %p237
      // Predicated region
      $region33: #{tpu_custom_call.1} parent=5 // pred_check
        _
      $region34: #{tpu_custom_call.1} parent=5 // pred_check_branch
        %240 = sbr.rel (%p237) target = $region36
      $region35: #{tpu_custom_call.1} parent=5 // pred_region
        %s241 = ssub.s32 %s17, 1
        %s242 = sand.u32 %s42, 1
        %s243 = scalar_lea.sflag [#allocation3], %s242
        %s244 = sand.u32 %s42, 1
        %s245 = smul.addr %s244, 8
        %s246 = scalar_lea.vmem [#allocation2], %s245
        // Predicated region
        $region37: #{tpu_custom_call.1} parent=35 // pred_check
          %p247 = pneg %p55
        $region38: #{tpu_custom_call.1} parent=35 // pred_check_branch
          %249 = sbr.rel (%p247) target = $region40
        $region39: #{tpu_custom_call.1} parent=35 // pred_region
          %251 = dma.done %s243, 128
        $region40: #{tpu_custom_call.1} parent=35 // pred_fallthru
          _
        // Predicated region
        $region41: #{tpu_custom_call.1} parent=35 // pred_check
          %p252 = pneg %p81
        $region42: #{tpu_custom_call.1} parent=35 // pred_check_branch
          %254 = sbr.rel (%p252) target = $region44
        $region43: #{tpu_custom_call.1} parent=35 // pred_region
          %256 = dma.done [#allocation6], 512
        $region44: #{tpu_custom_call.1} parent=35 // pred_fallthru
          _
        // Predicated region
        $region45: #{tpu_custom_call.1} parent=35 // pred_check
          %p257 = pneg %p133
        $region46: #{tpu_custom_call.1} parent=35 // pred_check_branch
          %259 = sbr.rel (%p257) target = $region48
        $region47: #{tpu_custom_call.1} parent=35 // pred_region
          %261 = dma.done [#allocation6], 128
        $region48: #{tpu_custom_call.1} parent=35 // pred_fallthru
          _
        %s262 = sand.u32 %s42, 1
        %s263 = scalar_lea.sflag [#allocation3], %s262
        %s264 = sand.u32 %s42, 1
        %s265 = smul.addr %s264, 8
        %s266 = scalar_lea.vmem [#allocation2], %s265
        %p267 = pneg %p55
        %p268 = pneg %p52
        %p269 = pneg %p81
        %p270 = pneg %p78
        %p271 = scmp.lt.s32.totalorder %s26, 0
        %s272 = scalar_select %p271, %s26, 0
        %s273 = scalar_lea.vmem %s2, %s272
        %p274 = pneg %p107
        %p275 = pneg %p104
        %p276 = pneg %p133
        %p277 = pneg %p130
        %p278 = pneg %p161
        %p279 = pneg %p158
        %s280 = sand.u32 %s148, 1
        %s281 = scalar_lea.sflag [#allocation4], %s280
        %s282 = sand.u32 %s148, 1
        %s283 = smul.addr %s282, 8
        %s284 = scalar_lea.vmem [#allocation8], %s283
        %p285 = scmp.lt.s32.totalorder %s26, 0
        %s286 = scalar_select %p285, %s26, 0
        %s287 = scalar_lea.vmem %s2, %s286
        %v288 = vld [vmem:[%s246] sm:$0xff]
        %v289 = vld [vmem:[#allocation5] sm:$0xff]
        %v290 = vld [vmem:[#allocation5 + $0x8] sm:$0xff]
        %v291 = vld [vmem:[#allocation5 + $0x10] sm:$0xff]
        %v292 = vld [vmem:[#allocation5 + $0x18] sm:$0xff]
        %v293 = vld [vmem:[%s287] sm:$0x1]
        %v295 = vperm.slane %v293, 0
        %vm297 = vcmask 261120
        %v299 = vsel %vm297, %v288, 0
        %301 = vmatpush.msra.mxu0 0.0
        %302 = vmatpush.msra.mxu0 0.0
        %303 = vmatpush.msra.mxu0 0.0
        %304 = vmatpush.msra.mxu0 0.0
        %305 = vmatpush.msra.mxu0 0.0
        %306 = vmatpush.msra.mxu0 0.0
        %307 = vmatpush.msra.mxu0 0.0
        %308 = vmatpush.msra.mxu0 0.0
        %309 = vmatpush.msra.mxu0 0.0
        %310 = vmatpush.msra.mxu0 0.0
        %311 = vmatpush.msra.mxu0 0.0
        %312 = vmatpush.msra.mxu0 0.0
        %313 = vmatpush.msra.mxu0 %v292
        %314 = vmatpush.msra.mxu0 %v291
        %315 = vmatpush.msra.mxu0 %v290
        %316 = vmatpush.msra.mxu0 %v289
        %317 = vmatmul.f32.gmra.mxu0 %v299
        %v318 = vpop.f32.mrf.mxu0
        %v319 = vadd.f32 %v295, %v318
        %320 = vdwg.mxu0
        %vm321 = vcmp.ge.f32.partialorder %v319, 0.0
        %v322 = vmul.f32 %v319, 0.2
        %v323 = vsel %vm321, %v319, %v322
        %v324 = vld [vmem:[#allocation7] sm:$0xff]
        %v325 = vmul.f32 %v323, %v324
        %326 = vst [vmem:[%s284] sm:$0xff] %v325
        %s327 = sand.u32 %s148, 1
        %s328 = scalar_lea.sflag [#allocation4], %s327
        %s329 = sand.u32 %s148, 1
        %s330 = smul.addr %s329, 8
        %s331 = scalar_lea.vmem [#allocation8], %s330
        // Predicated region
        $region49: #{tpu_custom_call.1} parent=35 // pred_check
          %p332 = pneg %p158
        $region50: #{tpu_custom_call.1} parent=35 // pred_check_branch
          %334 = sbr.rel (%p332) target = $region52
        $region51: #{tpu_custom_call.1} parent=35 // pred_region
          %336 = vsyncadd %s328, 0
          %s337 = sadd.s32 %s26, %s27
          %s338 = smul.addr %s337, 8
          %s339 = scalar_lea.hbm %s4, %s338
          %s341 = sshll.u32 %s331, 4
          %s342 = int_to_ptr.vmem [resolvable:$true] %s341
          %s343 = sshll.u32 %s339, 4
          %s344 = int_to_ptr.hbm [resolvable:$true] %s343
          %346 = dma.vmem_to_hbm [thread:$0]  %s342, 128, %s344, %s328
        $region52: #{tpu_custom_call.1} parent=35 // pred_fallthru
          _
      $region36: #{tpu_custom_call.1} parent=5 // pred_fallthru
        _
      %p347 = scmp.le.s32.totalorder 2, %s17
      // Predicated region
      $region53: #{tpu_custom_call.1} parent=5 // pred_check
        %p348 = pneg %p347
      $region54: #{tpu_custom_call.1} parent=5 // pred_check_branch
        %350 = sbr.rel (%p348) target = $region56
      $region55: #{tpu_custom_call.1} parent=5 // pred_region
        %s351 = ssub.s32 %s17, 2
        // Predicated region
        $region57: #{tpu_custom_call.1} parent=55 // pred_check
          %p352 = pneg %p164
        $region58: #{tpu_custom_call.1} parent=55 // pred_check_branch
          %354 = sbr.rel (%p352) target = $region60
        $region59: #{tpu_custom_call.1} parent=55 // pred_region
          %s355 = sand.u32 %s149, 1
          %s356 = scalar_lea.sflag [#allocation4], %s355
          %s357 = sand.u32 %s149, 1
          %s358 = smul.addr %s357, 8
          %s359 = scalar_lea.vmem [#allocation8], %s358
          %361 = dma.done %s356, 128
        $region60: #{tpu_custom_call.1} parent=55 // pred_fallthru
          _
      $region56: #{tpu_custom_call.1} parent=5 // pred_fallthru
        _
    $region6: #{tpu_custom_call.1} parent=1 // loop_footer
      %s21 = sadd.s32 1, %s17
    $region7: #{tpu_custom_call.1} parent=1 // loop_footer_branch
      %16 = sbr.rel target = $region3
    $region8: #{tpu_custom_call.1} parent=1 // loop_exit
      _
    %362 = vsyncpa [#allocation3], 1
    %s363 = scalar_lea.sflag [#allocation3], 1
    %364 = vsyncpa %s363, 1
    %365 = vsyncpa [#allocation6], 1
    %366 = vsyncpa [#allocation4], 1
    %s367 = scalar_lea.sflag [#allocation4], 1
    %368 = vsyncpa %s367, 1

</llo_original>
